<compile_context>
chip_gen: v7x
topology: tpu7x:2x2x1
jax: 0.10.0
libtpu: 0.0.40
codegen_flags: <defaults>
</compile_context>

<pallas_src>
import jax
import jax.numpy as jnp
from jax import lax
from jax.experimental import pallas as pl
from jax.experimental.pallas import tpu as pltpu


def _clip_to_clap_kernel(x_ref, w1_ref, b1_ref, w2_ref, b2_ref, w3_ref, b3_ref,
                         o_ref):
    eps = 1e-12                       # F.normalize clamp
    dot_dtype = w1_ref.dtype          # f32 or bf16 — matmul operands only

    # --- input L2 normalize along feature dim (dim=1); f32 math on VPU/EUP ---
    x = x_ref[...].astype(jnp.float32)
    ss = jnp.sum(x * x, axis=1, keepdims=True)
    # max(||x||, eps) == sqrt(max(ss, eps^2)); rsqrt executes on the EUP slot.
    x = x * lax.rsqrt(jnp.maximum(ss, eps * eps))

    # --- fc1 + relu (MXU in operand dtype, f32 accumulation, f32 bias/ReLU) ---
    h = jnp.dot(x.astype(dot_dtype), w1_ref[...],
                preferred_element_type=jnp.float32) + b1_ref[...]
    h = jnp.maximum(h, 0.0)

    # --- fc2 + relu ---
    h = jnp.dot(h.astype(dot_dtype), w2_ref[...],
                preferred_element_type=jnp.float32) + b2_ref[...]
    h = jnp.maximum(h, 0.0)

    # --- fc3 ---
    out = jnp.dot(h.astype(dot_dtype), w3_ref[...],
                  preferred_element_type=jnp.float32) + b3_ref[...]

    # --- output L2 normalize along feature dim ---
    ss_o = jnp.sum(out * out, axis=1, keepdims=True)
    out = out * lax.rsqrt(jnp.maximum(ss_o, eps * eps))

    o_ref[...] = out.astype(o_ref.dtype)


def _round_up(n, m):
    return ((n + m - 1) // m) * m


def clip_to_clap(x, params, *, block_b=256, use_bf16_matmul=True):
    """x: (B, input_dim) float32. params: dict with pre-transposed (in,out) weights.

    block_b: batch tile size (>=128 keeps the MXU's M dimension busy on real sizes;
             automatically shrunk to the padded batch for tiny demos).
    use_bf16_matmul: cast matmul operands to bf16 (f32 accumulation kept).
    """
    B, Din = x.shape
    H = params["w1"].shape[1]
    Dout = params["w3"].shape[1]

    # Batch tile: multiple of 8 sublanes (f32), capped at block_b.
    tb = min(block_b, _round_up(B, 8))
    Bp = _round_up(B, tb)
    if Bp != B:
        x = jnp.pad(x, ((0, Bp - B), (0, 0)))

    wt_dtype = jnp.bfloat16 if use_bf16_matmul else jnp.float32
    w1 = params["w1"].astype(wt_dtype)
    w2 = params["w2"].astype(wt_dtype)
    w3 = params["w3"].astype(wt_dtype)
    b1, b2, b3 = params["b1"], params["b2"], params["b3"]   # stay f32, (1, dout)

    grid = (Bp // tb,)
    x_spec = pl.BlockSpec((tb, Din), lambda i: (i, 0))
    o_spec = pl.BlockSpec((tb, Dout), lambda i: (i, 0))

    def resident(shape):
        # Whole-array block, constant index_map -> DMA'd once, stays VMEM-resident.
        return pl.BlockSpec(shape, lambda i: (0, 0))

    flops = 2 * Bp * (Din * H + H * H + H * Dout)
    bytes_accessed = (
        x.size * x.dtype.itemsize
        + sum(a.size * a.dtype.itemsize for a in (w1, w2, w3, b1, b2, b3))
        + Bp * Dout * 4)

    out = pl.pallas_call(
        _clip_to_clap_kernel,
        out_shape=jax.ShapeDtypeStruct((Bp, Dout), jnp.float32),
        grid=grid,
        in_specs=[x_spec,
                  resident(w1.shape), resident(b1.shape),
                  resident(w2.shape), resident(b2.shape),
                  resident(w3.shape), resident(b3.shape)],
        out_specs=o_spec,
        compiler_params=pltpu.CompilerParams(
            dimension_semantics=("parallel",)),
        cost_estimate=pl.CostEstimate(flops=flops, transcendentals=0,
                                      bytes_accessed=bytes_accessed),
    )(x, w1, b1, w2, b2, w3, b3)

    return out[:B]


def init_params(key, input_dim, hidden_dim, output_dim):
    """Deterministic synthetic init. Weights stored as (in_dim, out_dim)."""
    ks = jax.random.split(key, 6)

    def lin(kw, kb, din, dout):
        bound = 1.0 / jnp.sqrt(din)
        w = jax.random.uniform(kw, (din, dout), jnp.float32, -bound, bound)
        b = jax.random.uniform(kb, (1, dout), jnp.float32, -bound, bound)
        return w, b

    w1, b1 = lin(ks[0], ks[1], input_dim, hidden_dim)
    w2, b2 = lin(ks[2], ks[3], hidden_dim, hidden_dim)
    w3, b3 = lin(ks[4], ks[5], hidden_dim, output_dim)
    return {"w1": w1, "b1": b1, "w2": w2, "b2": b2, "w3": w3, "b3": b3}


def reference(x, params):
    """Pure-JAX f32 reference of the PyTorch forward."""
    eps = 1e-12
    xn = x / jnp.maximum(jnp.linalg.norm(x, axis=1, keepdims=True), eps)
    h = jnp.maximum(xn @ params["w1"] + params["b1"], 0.0)
    h = jnp.maximum(h @ params["w2"] + params["b2"], 0.0)
    o = h @ params["w3"] + params["b3"]
    return o / jnp.maximum(jnp.linalg.norm(o, axis=1, keepdims=True), eps)


if __name__ == "__main__":
    # Small shapes consistent with the module (orig: input=hidden=output=512).
    # B deliberately not a multiple of 8 to exercise the padding path.
    B, INPUT_DIM, HIDDEN_DIM, OUTPUT_DIM = 12, 128, 128, 128

    key = jax.random.PRNGKey(0)
    kx, kp = jax.random.split(key)
    x = jax.random.normal(kx, (B, INPUT_DIM), jnp.float32)
    params = init_params(kp, INPUT_DIM, HIDDEN_DIM, OUTPUT_DIM)

    ref = reference(x, params)

    # f32 matmul path: tight tolerance.
    out_f32 = jax.block_until_ready(clip_to_clap(x, params, use_bf16_matmul=False))
    assert out_f32.shape == (B, OUTPUT_DIM)
    assert jnp.allclose(out_f32, ref, atol=1e-4, rtol=1e-4), "f32 mismatch vs reference"

    # bf16-operand matmul path (f32 accumulation): looser tolerance.
    out_bf16 = jax.block_until_ready(clip_to_clap(x, params, use_bf16_matmul=True))
    assert out_bf16.shape == (B, OUTPUT_DIM)
    assert jnp.allclose(out_bf16, ref, atol=3e-2, rtol=3e-2), "bf16 mismatch vs reference"

    print("KERNEL_OK")
</pallas_src>

<mosaic_0001>
module attributes {stable_mosaic.version = 11 : i64} {
  func.func @_clip_to_clap_kernel(%arg0: i32, %arg1: memref<16x128xf32, #tpu.memory_space<vmem>>, %arg2: memref<128x128xf32, #tpu.memory_space<vmem>>, %arg3: memref<1x128xf32, #tpu.memory_space<vmem>>, %arg4: memref<128x128xf32, #tpu.memory_space<vmem>>, %arg5: memref<1x128xf32, #tpu.memory_space<vmem>>, %arg6: memref<128x128xf32, #tpu.memory_space<vmem>>, %arg7: memref<1x128xf32, #tpu.memory_space<vmem>>, %arg8: memref<16x128xf32, #tpu.memory_space<vmem>>) attributes {dimension_semantics = [#tpu.dimension_semantics<parallel>], iteration_bounds = array<i64: 1>, scalar_prefetch = 0 : i64, scratch_operands = 0 : i64, tpu.core_type = #tpu.core_type<tc>, window_params = [{transform_indices = @transform_0, window_bounds = array<i64: 16, 128>}, {pipeline_mode = #tpu.pipeline_mode<synchronous>, transform_indices = @transform_1, window_bounds = array<i64: 128, 128>}, {pipeline_mode = #tpu.pipeline_mode<synchronous>, transform_indices = @transform_2, window_bounds = array<i64: 1, 128>}, {pipeline_mode = #tpu.pipeline_mode<synchronous>, transform_indices = @transform_3, window_bounds = array<i64: 128, 128>}, {pipeline_mode = #tpu.pipeline_mode<synchronous>, transform_indices = @transform_4, window_bounds = array<i64: 1, 128>}, {pipeline_mode = #tpu.pipeline_mode<synchronous>, transform_indices = @transform_5, window_bounds = array<i64: 128, 128>}, {pipeline_mode = #tpu.pipeline_mode<synchronous>, transform_indices = @transform_6, window_bounds = array<i64: 1, 128>}, {transform_indices = @transform_7, window_bounds = array<i64: 16, 128>}]} {
    %c0 = arith.constant 0 : index
    %c0_0 = arith.constant 0 : index
    %0 = vector.load %arg1[%c0, %c0_0] : memref<16x128xf32, #tpu.memory_space<vmem>>, vector<16x128xf32>
    %1 = arith.mulf %0, %0 : vector<16x128xf32>
    %cst = arith.constant dense<0.000000e+00> : vector<16xf32>
    %2 = vector.multi_reduction <add>, %1, %cst [1] : vector<16x128xf32> to vector<16xf32>
    %3 = vector.shape_cast %2 : vector<16xf32> to vector<16x1xf32>
    %cst_1 = arith.constant 1.000000e-24 : f32
    %4 = vector.broadcast %cst_1 : f32 to vector<16x1xf32>
    %5 = arith.maximumf %3, %4 : vector<16x1xf32>
    %6 = math.rsqrt %5 : vector<16x1xf32>
    %7 = vector.broadcast %6 : vector<16x1xf32> to vector<16x128xf32>
    %8 = arith.mulf %0, %7 : vector<16x128xf32>
    %c0_2 = arith.constant 0 : index
    %c0_3 = arith.constant 0 : index
    %9 = vector.load %arg2[%c0_2, %c0_3] : memref<128x128xf32, #tpu.memory_space<vmem>>, vector<128x128xf32>
    %cst_4 = arith.constant dense<0.000000e+00> : vector<16x128xf32>
    %10 = tpu.matmul %8, %9, %cst_4 {dimension_numbers = #tpu.dot_dimension_numbers<[1], [0], [0], [1], [0, 0, 1, 1], [], []>} : vector<16x128xf32>, vector<128x128xf32>, vector<16x128xf32> -> vector<16x128xf32>
    %c0_5 = arith.constant 0 : index
    %c0_6 = arith.constant 0 : index
    %11 = vector.load %arg3[%c0_5, %c0_6] : memref<1x128xf32, #tpu.memory_space<vmem>>, vector<1x128xf32>
    %12 = vector.broadcast %11 : vector<1x128xf32> to vector<16x128xf32>
    %13 = arith.addf %10, %12 : vector<16x128xf32>
    %cst_7 = arith.constant 0.000000e+00 : f32
    %14 = vector.broadcast %cst_7 : f32 to vector<16x128xf32>
    %15 = arith.maximumf %13, %14 : vector<16x128xf32>
    %c0_8 = arith.constant 0 : index
    %c0_9 = arith.constant 0 : index
    %16 = vector.load %arg4[%c0_8, %c0_9] : memref<128x128xf32, #tpu.memory_space<vmem>>, vector<128x128xf32>
    %cst_10 = arith.constant dense<0.000000e+00> : vector<16x128xf32>
    %17 = tpu.matmul %15, %16, %cst_10 {dimension_numbers = #tpu.dot_dimension_numbers<[1], [0], [0], [1], [0, 0, 1, 1], [], []>} : vector<16x128xf32>, vector<128x128xf32>, vector<16x128xf32> -> vector<16x128xf32>
    %c0_11 = arith.constant 0 : index
    %c0_12 = arith.constant 0 : index
    %18 = vector.load %arg5[%c0_11, %c0_12] : memref<1x128xf32, #tpu.memory_space<vmem>>, vector<1x128xf32>
    %19 = vector.broadcast %18 : vector<1x128xf32> to vector<16x128xf32>
    %20 = arith.addf %17, %19 : vector<16x128xf32>
    %cst_13 = arith.constant 0.000000e+00 : f32
    %21 = vector.broadcast %cst_13 : f32 to vector<16x128xf32>
    %22 = arith.maximumf %20, %21 : vector<16x128xf32>
    %c0_14 = arith.constant 0 : index
    %c0_15 = arith.constant 0 : index
    %23 = vector.load %arg6[%c0_14, %c0_15] : memref<128x128xf32, #tpu.memory_space<vmem>>, vector<128x128xf32>
    %cst_16 = arith.constant dense<0.000000e+00> : vector<16x128xf32>
    %24 = tpu.matmul %22, %23, %cst_16 {dimension_numbers = #tpu.dot_dimension_numbers<[1], [0], [0], [1], [0, 0, 1, 1], [], []>} : vector<16x128xf32>, vector<128x128xf32>, vector<16x128xf32> -> vector<16x128xf32>
    %c0_17 = arith.constant 0 : index
    %c0_18 = arith.constant 0 : index
    %25 = vector.load %arg7[%c0_17, %c0_18] : memref<1x128xf32, #tpu.memory_space<vmem>>, vector<1x128xf32>
    %26 = vector.broadcast %25 : vector<1x128xf32> to vector<16x128xf32>
    %27 = arith.addf %24, %26 : vector<16x128xf32>
    %28 = arith.mulf %27, %27 : vector<16x128xf32>
    %cst_19 = arith.constant dense<0.000000e+00> : vector<16xf32>
    %29 = vector.multi_reduction <add>, %28, %cst_19 [1] : vector<16x128xf32> to vector<16xf32>
    %30 = vector.shape_cast %29 : vector<16xf32> to vector<16x1xf32>
    %cst_20 = arith.constant 1.000000e-24 : f32
    %31 = vector.broadcast %cst_20 : f32 to vector<16x1xf32>
    %32 = arith.maximumf %30, %31 : vector<16x1xf32>
    %33 = math.rsqrt %32 : vector<16x1xf32>
    %34 = vector.broadcast %33 : vector<16x1xf32> to vector<16x128xf32>
    %35 = arith.mulf %27, %34 : vector<16x128xf32>
    %c0_21 = arith.constant 0 : index
    %c0_22 = arith.constant 0 : index
    %36 = vector.load %arg8[%c0_21, %c0_22] : memref<16x128xf32, #tpu.memory_space<vmem>>, vector<16x128xf32>
    tpu.vector_store %arg8[%c0_21, %c0_22], %35 {strides = array<i32>} : memref<16x128xf32, #tpu.memory_space<vmem>>, vector<16x128xf32>,
    return
  }
  func.func @transform_0(%arg0: i32) -> (i32, i32) {
    %c0_i32 = arith.constant 0 : i32
    %c0_i32_0 = arith.constant 0 : i32
    return %arg0, %c0_i32 : i32, i32
  }
  func.func @transform_1(%arg0: i32) -> (i32, i32) {
    %c0_i32 = arith.constant 0 : i32
    %c0_i32_0 = arith.constant 0 : i32
    %c0_i32_1 = arith.constant 0 : i32
    return %c0_i32, %c0_i32_0 : i32, i32
  }
  func.func @transform_2(%arg0: i32) -> (i32, i32) {
    %c0_i32 = arith.constant 0 : i32
    %c0_i32_0 = arith.constant 0 : i32
    %c0_i32_1 = arith.constant 0 : i32
    return %c0_i32, %c0_i32_0 : i32, i32
  }
  func.func @transform_3(%arg0: i32) -> (i32, i32) {
    %c0_i32 = arith.constant 0 : i32
    %c0_i32_0 = arith.constant 0 : i32
    %c0_i32_1 = arith.constant 0 : i32
    return %c0_i32, %c0_i32_0 : i32, i32
  }
  func.func @transform_4(%arg0: i32) -> (i32, i32) {
    %c0_i32 = arith.constant 0 : i32
    %c0_i32_0 = arith.constant 0 : i32
    %c0_i32_1 = arith.constant 0 : i32
    return %c0_i32, %c0_i32_0 : i32, i32
  }
  func.func @transform_5(%arg0: i32) -> (i32, i32) {
    %c0_i32 = arith.constant 0 : i32
    %c0_i32_0 = arith.constant 0 : i32
    %c0_i32_1 = arith.constant 0 : i32
    return %c0_i32, %c0_i32_0 : i32, i32
  }
  func.func @transform_6(%arg0: i32) -> (i32, i32) {
    %c0_i32 = arith.constant 0 : i32
    %c0_i32_0 = arith.constant 0 : i32
    %c0_i32_1 = arith.constant 0 : i32
    return %c0_i32, %c0_i32_0 : i32, i32
  }
  func.func @transform_7(%arg0: i32) -> (i32, i32) {
    %c0_i32 = arith.constant 0 : i32
    %c0_i32_0 = arith.constant 0 : i32
    return %arg0, %c0_i32 : i32, i32
  }
}

</mosaic_0001>

<llo_original>
// kernel: tpu_custom_call.1
$region0: #{tpu_custom_call.1}
  #allocation0 [shape = 'u32[]', space=smem, size = 0x4, offset = 0x4, fixed_abs, tag = 'smem constant byte address 0x4 - core index']
  #allocation1 [shape = 'u32[144,128]{1,0:T(1,128)}', space=vmem, size = 0x12000, scoped, tag = 'internal scratch']
  %s0 = inlined_call_operand.hbm [shape: f32[16,128], index: 0, kind: input, shape index: {}]
  %s1 = inlined_call_operand.hbm [shape: f32[128,128], index: 1, kind: input, shape index: {}]
  %s2 = inlined_call_operand.vmem [shape: f32[1,128], index: 2, kind: input, shape index: {}]
  %s3 = inlined_call_operand.hbm [shape: f32[128,128], index: 3, kind: input, shape index: {}]
  %s4 = inlined_call_operand.vmem [shape: f32[1,128], index: 4, kind: input, shape index: {}]
  %s5 = inlined_call_operand.hbm [shape: f32[128,128], index: 5, kind: input, shape index: {}]
  %s6 = inlined_call_operand.vmem [shape: f32[1,128], index: 6, kind: input, shape index: {}]
  %s7 = inlined_call_operand.hbm [shape: f32[16,128], index: 7, kind: output, shape index: {}]
  %s8 = sld [smem:[#allocation0]]
  $region54: #{tpu_custom_call.1} parent=0
    _
  %s10 = ssub.s32 1, %s8
  %s11 = scalar_select 0, %s10, %s8
  $region1: #{tpu_custom_call.1} parent=0
    #allocation2 [shape = 'u8[8192]{0}', space=vmem, size = 0x2000, scoped, tag = 'input window, operand 0, single buffered']
    #allocation3 [shape = 's32[1]{0}', space=sflag, size = 0x4, scoped, tag = 'scoped memory for tpu_custom_call.1']
    #allocation4 [shape = 's32[1]{0}', space=sflag, size = 0x4, scoped, tag = 'scoped memory for tpu_custom_call.1']
    #allocation5 [shape = 'u8[65536]{0}', space=vmem, size = 0x10000, scoped, tag = 'input window, operand 1, single buffered']
    #allocation6 [shape = 's32[1]{0}', space=sflag, size = 0x4, scoped, tag = 'scoped memory for tpu_custom_call.1']
    #allocation7 [shape = 'u8[65536]{0}', space=vmem, size = 0x10000, scoped, tag = 'input window, operand 3, single buffered']
    #allocation8 [shape = 'u8[65536]{0}', space=vmem, size = 0x10000, scoped, tag = 'input window, operand 5, single buffered']
    #allocation9 [shape = 's32[1]{0}', space=sflag, size = 0x4, scoped, tag = 'scoped memory for tpu_custom_call.1']
    #allocation10 [shape = 'u8[8192]{0}', space=vmem, size = 0x2000, scoped, tag = 'output window, operand 0, single buffered']
    %12 = vsyncpa [#allocation3], 0
    %13 = vsyncpa [#allocation6], 0
    %14 = vsyncpa [#allocation9], 0
    %15 = vsyncpa [#allocation4], 0
    // Predicated region
    $region2: #{tpu_custom_call.1} parent=1 // pred_check
      _
    $region3: #{tpu_custom_call.1} parent=1 // pred_check_branch
      %17 = sbr.rel (0) target = $region5
    $region4: #{tpu_custom_call.1} parent=1 // pred_region
      %s19 = ssub.s32 256, 256
      %20 = vsyncadd [#allocation3], %s19
      %s21 = sshll.u32 [#allocation2], 4
      %s22 = int_to_ptr.vmem [resolvable:$true] %s21
      %27 = dma.hbm_to_vmem [thread:$0]  %s0, 256, %s22, [#allocation3], 128, 128, 8
    $region5: #{tpu_custom_call.1} parent=1 // pred_fallthru
      _
    // Predicated region
    $region6: #{tpu_custom_call.1} parent=1 // pred_check
      _
    $region7: #{tpu_custom_call.1} parent=1 // pred_check_branch
      %29 = sbr.rel (0) target = $region9
    $region8: #{tpu_custom_call.1} parent=1 // pred_region
      %s31 = ssub.s32 2048, 2048
      %32 = vsyncadd [#allocation6], %s31
      %s33 = sshll.u32 [#allocation5], 4
      %s34 = int_to_ptr.vmem [resolvable:$true] %s33
      %39 = dma.hbm_to_vmem [thread:$0]  %s1, 2048, %s34, [#allocation6], 128, 128, 8
    $region9: #{tpu_custom_call.1} parent=1 // pred_fallthru
      _
    // Predicated region
    $region10: #{tpu_custom_call.1} parent=1 // pred_check
      _
    $region11: #{tpu_custom_call.1} parent=1 // pred_check_branch
      %41 = sbr.rel (0) target = $region13
    $region12: #{tpu_custom_call.1} parent=1 // pred_region
      _
    $region13: #{tpu_custom_call.1} parent=1 // pred_fallthru
      _
    // Predicated region
    $region14: #{tpu_custom_call.1} parent=1 // pred_check
      _
    $region15: #{tpu_custom_call.1} parent=1 // pred_check_branch
      %43 = sbr.rel (0) target = $region17
    $region16: #{tpu_custom_call.1} parent=1 // pred_region
      %s45 = ssub.s32 2048, 2048
      %46 = vsyncadd [#allocation6], %s45
      %s47 = sshll.u32 [#allocation7], 4
      %s48 = int_to_ptr.vmem [resolvable:$true] %s47
      %53 = dma.hbm_to_vmem [thread:$0]  %s3, 2048, %s48, [#allocation6], 128, 128, 8
    $region17: #{tpu_custom_call.1} parent=1 // pred_fallthru
      _
    // Predicated region
    $region18: #{tpu_custom_call.1} parent=1 // pred_check
      _
    $region19: #{tpu_custom_call.1} parent=1 // pred_check_branch
      %55 = sbr.rel (0) target = $region21
    $region20: #{tpu_custom_call.1} parent=1 // pred_region
      _
    $region21: #{tpu_custom_call.1} parent=1 // pred_fallthru
      _
    // Predicated region
    $region22: #{tpu_custom_call.1} parent=1 // pred_check
      _
    $region23: #{tpu_custom_call.1} parent=1 // pred_check_branch
      %57 = sbr.rel (0) target = $region25
    $region24: #{tpu_custom_call.1} parent=1 // pred_region
      %s59 = ssub.s32 2048, 2048
      %60 = vsyncadd [#allocation9], %s59
      %s61 = sshll.u32 [#allocation8], 4
      %s62 = int_to_ptr.vmem [resolvable:$true] %s61
      %67 = dma.hbm_to_vmem [thread:$0]  %s5, 2048, %s62, [#allocation9], 128, 128, 8
    $region25: #{tpu_custom_call.1} parent=1 // pred_fallthru
      _
    // Predicated region
    $region26: #{tpu_custom_call.1} parent=1 // pred_check
      _
    $region27: #{tpu_custom_call.1} parent=1 // pred_check_branch
      %69 = sbr.rel (0) target = $region29
    $region28: #{tpu_custom_call.1} parent=1 // pred_region
      _
    $region29: #{tpu_custom_call.1} parent=1 // pred_fallthru
      _
    // Predicated region
    $region30: #{tpu_custom_call.1} parent=1 // pred_check
      _
    $region31: #{tpu_custom_call.1} parent=1 // pred_check_branch
      %71 = sbr.rel (0) target = $region33
    $region32: #{tpu_custom_call.1} parent=1 // pred_region
      %72 = dma.done [#allocation3], 256
    $region33: #{tpu_custom_call.1} parent=1 // pred_fallthru
      _
    // Predicated region
    $region34: #{tpu_custom_call.1} parent=1 // pred_check
      _
    $region35: #{tpu_custom_call.1} parent=1 // pred_check_branch
      %74 = sbr.rel (0) target = $region37
    $region36: #{tpu_custom_call.1} parent=1 // pred_region
      %75 = dma.done [#allocation6], 2048
    $region37: #{tpu_custom_call.1} parent=1 // pred_fallthru
      _
    // Predicated region
    $region38: #{tpu_custom_call.1} parent=1 // pred_check
      _
    $region39: #{tpu_custom_call.1} parent=1 // pred_check_branch
      %77 = sbr.rel (0) target = $region41
    $region40: #{tpu_custom_call.1} parent=1 // pred_region
      %78 = dma.done [#allocation6], 2048
    $region41: #{tpu_custom_call.1} parent=1 // pred_fallthru
      _
    // Predicated region
    $region42: #{tpu_custom_call.1} parent=1 // pred_check
      _
    $region43: #{tpu_custom_call.1} parent=1 // pred_check_branch
      %80 = sbr.rel (0) target = $region45
    $region44: #{tpu_custom_call.1} parent=1 // pred_region
      %81 = dma.done [#allocation9], 2048
    $region45: #{tpu_custom_call.1} parent=1 // pred_fallthru
      _
    %v82 = vld [vmem:[#allocation2] sm:$0xff]
    %v83 = vld [vmem:[#allocation2 + $0x8] sm:$0xff]
    %v84 = vmul.f32 %v82, %v82
    %v85 = vmul.f32 %v83, %v83
    %86 = vadd.xlane.f32.xlu0 %v84
    %v87 = vpop.xlane.xlu0 %86
    %88 = vadd.xlane.f32.xlu0 %v85
    %v89 = vpop.xlane.xlu0 %88
    %v90 = vmax.f32 %v87, 1e-24
    %v91 = vmax.f32 %v89, 1e-24
    %v92 = vrsqrt.pop %v90
    %v93 = vrsqrt.pop %v91
    %v94 = vmul.f32 %v82, %v92
    %v95 = vmul.f32 %v83, %v93
    %v96 = vld [vmem:[#allocation5] sm:$0xff]
    %v97 = vld [vmem:[#allocation5 + $0x8] sm:$0xff]
    %v98 = vld [vmem:[#allocation5 + $0x10] sm:$0xff]
    %v99 = vld [vmem:[#allocation5 + $0x18] sm:$0xff]
    %v100 = vld [vmem:[#allocation5 + $0x20] sm:$0xff]
    %v101 = vld [vmem:[#allocation5 + $0x28] sm:$0xff]
    %v102 = vld [vmem:[#allocation5 + $0x30] sm:$0xff]
    %v103 = vld [vmem:[#allocation5 + $0x38] sm:$0xff]
    %v104 = vld [vmem:[#allocation5 + $0x40] sm:$0xff]
    %v105 = vld [vmem:[#allocation5 + $0x48] sm:$0xff]
    %v106 = vld [vmem:[#allocation5 + $0x50] sm:$0xff]
    %v107 = vld [vmem:[#allocation5 + $0x58] sm:$0xff]
    %v108 = vld [vmem:[#allocation5 + $0x60] sm:$0xff]
    %v109 = vld [vmem:[#allocation5 + $0x68] sm:$0xff]
    %v110 = vld [vmem:[#allocation5 + $0x70] sm:$0xff]
    %v111 = vld [vmem:[#allocation5 + $0x78] sm:$0xff]
    %v112 = vld [vmem:[%s2] sm:$0x1]
    %v114 = vlaneseq
    %v115 = vshrl.u32 %v114, 7
    %v116 = vsub.s32 0, %v115
    %v117 = vrot.slane %v112, %v116
    %119 = vmatprep.subr.mxu0 0.0
    %120 = vmatpush1.msra.mxu0 %v96
    %121 = vmatprep.subr.mxu0 0.0
    %122 = vmatpush1.msra.mxu0 %v97
    %123 = vmatprep.subr.mxu0 0.0
    %124 = vmatpush1.msra.mxu0 %v98
    %125 = vmatprep.subr.mxu0 0.0
    %126 = vmatpush1.msra.mxu0 %v99
    %127 = vmatprep.subr.mxu0 0.0
    %128 = vmatpush1.msra.mxu0 %v100
    %129 = vmatprep.subr.mxu0 0.0
    %130 = vmatpush1.msra.mxu0 %v101
    %131 = vmatprep.subr.mxu0 0.0
    %132 = vmatpush1.msra.mxu0 %v102
    %133 = vmatprep.subr.mxu0 0.0
    %134 = vmatpush1.msra.mxu0 %v103
    %135 = vmatprep.subr.mxu0 0.0
    %136 = vmatpush1.msra.mxu0 %v104
    %137 = vmatprep.subr.mxu0 0.0
    %138 = vmatpush1.msra.mxu0 %v105
    %139 = vmatprep.subr.mxu0 0.0
    %140 = vmatpush1.msra.mxu0 %v106
    %141 = vmatprep.subr.mxu0 0.0
    %142 = vmatpush1.msra.mxu0 %v107
    %143 = vmatprep.subr.mxu0 0.0
    %144 = vmatpush1.msra.mxu0 %v108
    %145 = vmatprep.subr.mxu0 0.0
    %146 = vmatpush1.msra.mxu0 %v109
    %147 = vmatprep.subr.mxu0 0.0
    %148 = vmatpush1.msra.mxu0 %v110
    %149 = vmatprep.subr.mxu0 0.0
    %150 = vmatpush1.msra.mxu0 %v111
    %151 = vmatprep.subr.mxu0 0.0
    %152 = vmatpush1.msra.mxu0 0.0
    %153 = vmatprep.subr.mxu0 0.0
    %154 = vmatpush1.msra.mxu0 0.0
    %155 = vmatprep.subr.mxu0 0.0
    %156 = vmatpush1.msra.mxu0 0.0
    %157 = vmatprep.subr.mxu0 0.0
    %158 = vmatpush1.msra.mxu0 0.0
    %159 = vmatprep.subr.mxu0 0.0
    %160 = vmatpush1.msra.mxu0 0.0
    %161 = vmatprep.subr.mxu0 0.0
    %162 = vmatpush1.msra.mxu0 0.0
    %163 = vmatprep.subr.mxu0 0.0
    %164 = vmatpush1.msra.mxu0 0.0
    %165 = vmatprep.subr.mxu0 0.0
    %166 = vmatpush1.msra.mxu0 0.0
    %167 = vmatprep.subr.mxu0 0.0
    %168 = vmatpush1.msra.mxu0 0.0
    %169 = vmatprep.subr.mxu0 0.0
    %170 = vmatpush1.msra.mxu0 0.0
    %171 = vmatprep.subr.mxu0 0.0
    %172 = vmatpush1.msra.mxu0 0.0
    %173 = vmatprep.subr.mxu0 0.0
    %174 = vmatpush1.msra.mxu0 0.0
    %175 = vmatprep.subr.mxu0 0.0
    %176 = vmatpush1.msra.mxu0 0.0
    %177 = vmatprep.subr.mxu0 0.0
    %178 = vmatpush1.msra.mxu0 0.0
    %179 = vmatprep.subr.mxu0 0.0
    %180 = vmatpush1.msra.mxu0 0.0
    %181 = vmatprep.subr.mxu0 0.0
    %182 = vmatpush1.msra.mxu0 0.0
    %183 = vmatprep.mubr.f32.mxu0 0.0
    %184 = vmatmul.mubr.f32.gmra.mrb[0].mxu0 %v94
    %v185 = vpop.f32.mrb[0].mxu0
    %v186 = vadd.f32 %v117, %v185
    %v187 = vpop.f32.mrb[0].mxu0
    %188 = vmatprep.mubr.f32.mxu0 0.0
    %189 = vmatmul.mubr.f32.gmra.mrb[0].mxu0 %v95
    %v190 = vpop.f32.mrb[0].mxu0
    %v191 = vadd.f32 %v117, %v190
    %v192 = vpop.f32.mrb[0].mxu0
    %193 = vdwg.mxu0
    %v194 = vmax.f32 %v186, 0.0
    %v195 = vmax.f32 %v191, 0.0
    %v196 = vld [vmem:[#allocation7] sm:$0xff]
    %v197 = vld [vmem:[#allocation7 + $0x8] sm:$0xff]
    %v198 = vld [vmem:[#allocation7 + $0x10] sm:$0xff]
    %v199 = vld [vmem:[#allocation7 + $0x18] sm:$0xff]
    %v200 = vld [vmem:[#allocation7 + $0x20] sm:$0xff]
    %v201 = vld [vmem:[#allocation7 + $0x28] sm:$0xff]
    %v202 = vld [vmem:[#allocation7 + $0x30] sm:$0xff]
    %v203 = vld [vmem:[#allocation7 + $0x38] sm:$0xff]
    %v204 = vld [vmem:[#allocation7 + $0x40] sm:$0xff]
    %v205 = vld [vmem:[#allocation7 + $0x48] sm:$0xff]
    %v206 = vld [vmem:[#allocation7 + $0x50] sm:$0xff]
    %v207 = vld [vmem:[#allocation7 + $0x58] sm:$0xff]
    %v208 = vld [vmem:[#allocation7 + $0x60] sm:$0xff]
    %v209 = vld [vmem:[#allocation7 + $0x68] sm:$0xff]
    %v210 = vld [vmem:[#allocation7 + $0x70] sm:$0xff]
    %v211 = vld [vmem:[#allocation7 + $0x78] sm:$0xff]
    %v212 = vld [vmem:[%s4] sm:$0x1]
    %v214 = vlaneseq
    %v215 = vshrl.u32 %v214, 7
    %v216 = vsub.s32 0, %v215
    %v217 = vrot.slane %v212, %v216
    %219 = vmatprep.subr.mxu0 0.0
    %220 = vmatpush1.msra.mxu0 %v196
    %221 = vmatprep.subr.mxu0 0.0
    %222 = vmatpush1.msra.mxu0 %v197
    %223 = vmatprep.subr.mxu0 0.0
    %224 = vmatpush1.msra.mxu0 %v198
    %225 = vmatprep.subr.mxu0 0.0
    %226 = vmatpush1.msra.mxu0 %v199
    %227 = vmatprep.subr.mxu0 0.0
    %228 = vmatpush1.msra.mxu0 %v200
    %229 = vmatprep.subr.mxu0 0.0
    %230 = vmatpush1.msra.mxu0 %v201
    %231 = vmatprep.subr.mxu0 0.0
    %232 = vmatpush1.msra.mxu0 %v202
    %233 = vmatprep.subr.mxu0 0.0
    %234 = vmatpush1.msra.mxu0 %v203
    %235 = vmatprep.subr.mxu0 0.0
    %236 = vmatpush1.msra.mxu0 %v204
    %237 = vmatprep.subr.mxu0 0.0
    %238 = vmatpush1.msra.mxu0 %v205
    %239 = vmatprep.subr.mxu0 0.0
    %240 = vmatpush1.msra.mxu0 %v206
    %241 = vmatprep.subr.mxu0 0.0
    %242 = vmatpush1.msra.mxu0 %v207
    %243 = vmatprep.subr.mxu0 0.0
    %244 = vmatpush1.msra.mxu0 %v208
    %245 = vmatprep.subr.mxu0 0.0
    %246 = vmatpush1.msra.mxu0 %v209
    %247 = vmatprep.subr.mxu0 0.0
    %248 = vmatpush1.msra.mxu0 %v210
    %249 = vmatprep.subr.mxu0 0.0
    %250 = vmatpush1.msra.mxu0 %v211
    %251 = vmatprep.subr.mxu0 0.0
    %252 = vmatpush1.msra.mxu0 0.0
    %253 = vmatprep.subr.mxu0 0.0
    %254 = vmatpush1.msra.mxu0 0.0
    %255 = vmatprep.subr.mxu0 0.0
    %256 = vmatpush1.msra.mxu0 0.0
    %257 = vmatprep.subr.mxu0 0.0
    %258 = vmatpush1.msra.mxu0 0.0
    %259 = vmatprep.subr.mxu0 0.0
    %260 = vmatpush1.msra.mxu0 0.0
    %261 = vmatprep.subr.mxu0 0.0
    %262 = vmatpush1.msra.mxu0 0.0
    %263 = vmatprep.subr.mxu0 0.0
    %264 = vmatpush1.msra.mxu0 0.0
    %265 = vmatprep.subr.mxu0 0.0
    %266 = vmatpush1.msra.mxu0 0.0
    %267 = vmatprep.subr.mxu0 0.0
    %268 = vmatpush1.msra.mxu0 0.0
    %269 = vmatprep.subr.mxu0 0.0
    %270 = vmatpush1.msra.mxu0 0.0
    %271 = vmatprep.subr.mxu0 0.0
    %272 = vmatpush1.msra.mxu0 0.0
    %273 = vmatprep.subr.mxu0 0.0
    %274 = vmatpush1.msra.mxu0 0.0
    %275 = vmatprep.subr.mxu0 0.0
    %276 = vmatpush1.msra.mxu0 0.0
    %277 = vmatprep.subr.mxu0 0.0
    %278 = vmatpush1.msra.mxu0 0.0
    %279 = vmatprep.subr.mxu0 0.0
    %280 = vmatpush1.msra.mxu0 0.0
    %281 = vmatprep.subr.mxu0 0.0
    %282 = vmatpush1.msra.mxu0 0.0
    %283 = vmatprep.mubr.f32.mxu0 0.0
    %284 = vmatmul.mubr.f32.gmra.mrb[0].mxu0 %v194
    %v285 = vpop.f32.mrb[0].mxu0
    %v286 = vadd.f32 %v217, %v285
    %v287 = vpop.f32.mrb[0].mxu0
    %288 = vmatprep.mubr.f32.mxu0 0.0
    %289 = vmatmul.mubr.f32.gmra.mrb[0].mxu0 %v195
    %v290 = vpop.f32.mrb[0].mxu0
    %v291 = vadd.f32 %v217, %v290
    %v292 = vpop.f32.mrb[0].mxu0
    %293 = vdwg.mxu0
    %v294 = vmax.f32 %v286, 0.0
    %v295 = vmax.f32 %v291, 0.0
    %v296 = vld [vmem:[#allocation8] sm:$0xff]
    %v297 = vld [vmem:[#allocation8 + $0x8] sm:$0xff]
    %v298 = vld [vmem:[#allocation8 + $0x10] sm:$0xff]
    %v299 = vld [vmem:[#allocation8 + $0x18] sm:$0xff]
    %v300 = vld [vmem:[#allocation8 + $0x20] sm:$0xff]
    %v301 = vld [vmem:[#allocation8 + $0x28] sm:$0xff]
    %v302 = vld [vmem:[#allocation8 + $0x30] sm:$0xff]
    %v303 = vld [vmem:[#allocation8 + $0x38] sm:$0xff]
    %v304 = vld [vmem:[#allocation8 + $0x40] sm:$0xff]
    %v305 = vld [vmem:[#allocation8 + $0x48] sm:$0xff]
    %v306 = vld [vmem:[#allocation8 + $0x50] sm:$0xff]
    %v307 = vld [vmem:[#allocation8 + $0x58] sm:$0xff]
    %v308 = vld [vmem:[#allocation8 + $0x60] sm:$0xff]
    %v309 = vld [vmem:[#allocation8 + $0x68] sm:$0xff]
    %v310 = vld [vmem:[#allocation8 + $0x70] sm:$0xff]
    %v311 = vld [vmem:[#allocation8 + $0x78] sm:$0xff]
    %v312 = vld [vmem:[%s6] sm:$0x1]
    %v314 = vlaneseq
    %v315 = vshrl.u32 %v314, 7
    %v316 = vsub.s32 0, %v315
    %v317 = vrot.slane %v312, %v316
    %319 = vmatprep.subr.mxu0 0.0
    %320 = vmatpush1.msra.mxu0 %v296
    %321 = vmatprep.subr.mxu0 0.0
    %322 = vmatpush1.msra.mxu0 %v297
    %323 = vmatprep.subr.mxu0 0.0
    %324 = vmatpush1.msra.mxu0 %v298
    %325 = vmatprep.subr.mxu0 0.0
    %326 = vmatpush1.msra.mxu0 %v299
    %327 = vmatprep.subr.mxu0 0.0
    %328 = vmatpush1.msra.mxu0 %v300
    %329 = vmatprep.subr.mxu0 0.0
    %330 = vmatpush1.msra.mxu0 %v301
    %331 = vmatprep.subr.mxu0 0.0
    %332 = vmatpush1.msra.mxu0 %v302
    %333 = vmatprep.subr.mxu0 0.0
    %334 = vmatpush1.msra.mxu0 %v303
    %335 = vmatprep.subr.mxu0 0.0
    %336 = vmatpush1.msra.mxu0 %v304
    %337 = vmatprep.subr.mxu0 0.0
    %338 = vmatpush1.msra.mxu0 %v305
    %339 = vmatprep.subr.mxu0 0.0
    %340 = vmatpush1.msra.mxu0 %v306
    %341 = vmatprep.subr.mxu0 0.0
    %342 = vmatpush1.msra.mxu0 %v307
    %343 = vmatprep.subr.mxu0 0.0
    %344 = vmatpush1.msra.mxu0 %v308
    %345 = vmatprep.subr.mxu0 0.0
    %346 = vmatpush1.msra.mxu0 %v309
    %347 = vmatprep.subr.mxu0 0.0
    %348 = vmatpush1.msra.mxu0 %v310
    %349 = vmatprep.subr.mxu0 0.0
    %350 = vmatpush1.msra.mxu0 %v311
    %351 = vmatprep.subr.mxu0 0.0
    %352 = vmatpush1.msra.mxu0 0.0
    %353 = vmatprep.subr.mxu0 0.0
    %354 = vmatpush1.msra.mxu0 0.0
    %355 = vmatprep.subr.mxu0 0.0
    %356 = vmatpush1.msra.mxu0 0.0
    %357 = vmatprep.subr.mxu0 0.0
    %358 = vmatpush1.msra.mxu0 0.0
    %359 = vmatprep.subr.mxu0 0.0
    %360 = vmatpush1.msra.mxu0 0.0
    %361 = vmatprep.subr.mxu0 0.0
    %362 = vmatpush1.msra.mxu0 0.0
    %363 = vmatprep.subr.mxu0 0.0
    %364 = vmatpush1.msra.mxu0 0.0
    %365 = vmatprep.subr.mxu0 0.0
    %366 = vmatpush1.msra.mxu0 0.0
    %367 = vmatprep.subr.mxu0 0.0
    %368 = vmatpush1.msra.mxu0 0.0
    %369 = vmatprep.subr.mxu0 0.0
    %370 = vmatpush1.msra.mxu0 0.0
    %371 = vmatprep.subr.mxu0 0.0
    %372 = vmatpush1.msra.mxu0 0.0
    %373 = vmatprep.subr.mxu0 0.0
    %374 = vmatpush1.msra.mxu0 0.0
    %375 = vmatprep.subr.mxu0 0.0
    %376 = vmatpush1.msra.mxu0 0.0
    %377 = vmatprep.subr.mxu0 0.0
    %378 = vmatpush1.msra.mxu0 0.0
    %379 = vmatprep.subr.mxu0 0.0
    %380 = vmatpush1.msra.mxu0 0.0
    %381 = vmatprep.subr.mxu0 0.0
    %382 = vmatpush1.msra.mxu0 0.0
    %383 = vmatprep.mubr.f32.mxu0 0.0
    %384 = vmatmul.mubr.f32.gmra.mrb[0].mxu0 %v294
    %v385 = vpop.f32.mrb[0].mxu0
    %v386 = vadd.f32 %v317, %v385
    %v387 = vpop.f32.mrb[0].mxu0
    %388 = vmatprep.mubr.f32.mxu0 0.0
    %389 = vmatmul.mubr.f32.gmra.mrb[0].mxu0 %v295
    %v390 = vpop.f32.mrb[0].mxu0
    %v391 = vadd.f32 %v317, %v390
    %v392 = vpop.f32.mrb[0].mxu0
    %393 = vdwg.mxu0
    %v394 = vmul.f32 %v386, %v386
    %v395 = vmul.f32 %v391, %v391
    %396 = vadd.xlane.f32.xlu0 %v394
    %v397 = vpop.xlane.xlu0 %396
    %398 = vadd.xlane.f32.xlu0 %v395
    %v399 = vpop.xlane.xlu0 %398
    %v400 = vmax.f32 %v397, 1e-24
    %v401 = vmax.f32 %v399, 1e-24
    %v402 = vrsqrt.pop %v400
    %v403 = vrsqrt.pop %v401
    %v404 = vmul.f32 %v386, %v402
    %v405 = vmul.f32 %v391, %v403
    %406 = vst [vmem:[#allocation10] sm:$0xff] %v404
    %407 = vst [vmem:[#allocation10 + $0x8] sm:$0xff] %v405
    // Predicated region
    $region46: #{tpu_custom_call.1} parent=1 // pred_check
      _
    $region47: #{tpu_custom_call.1} parent=1 // pred_check_branch
      %409 = sbr.rel (0) target = $region49
    $region48: #{tpu_custom_call.1} parent=1 // pred_region
      %s411 = ssub.s32 256, 256
      %412 = vsyncadd [#allocation4], %s411
      %s413 = sshll.u32 [#allocation10], 4
      %s414 = int_to_ptr.vmem [resolvable:$true] %s413
      %419 = dma.vmem_to_hbm [thread:$0]  %s414, 256, %s7, [#allocation4], 128, 128, 8
    $region49: #{tpu_custom_call.1} parent=1 // pred_fallthru
      _
    // Predicated region
    $region50: #{tpu_custom_call.1} parent=1 // pred_check
      _
    $region51: #{tpu_custom_call.1} parent=1 // pred_check_branch
      %421 = sbr.rel (0) target = $region53
    $region52: #{tpu_custom_call.1} parent=1 // pred_region
      %422 = dma.done [#allocation4], 256
    $region53: #{tpu_custom_call.1} parent=1 // pred_fallthru
      _
    %423 = vsyncpa [#allocation3], 1
    %424 = vsyncpa [#allocation6], 1
    %425 = vsyncpa [#allocation9], 1
    %426 = vsyncpa [#allocation4], 1

</llo_original>
